<compile_context>
chip_gen: v7x
topology: tpu7x:2x2x1
jax: 0.10.0
libtpu: 0.0.40
codegen_flags: <defaults>
</compile_context>

<pallas_src>
import functools

import jax
import jax.numpy as jnp
import numpy as np
from jax.experimental import pallas as pl
from jax.experimental.pallas import tpu as pltpu

_NUM_STATS = 4          # prob_sum, intersection, target_count, ce_sum
_MAX_TL = 8192          # voxels (lanes) per grid step
_NUM_CORE_SPLITS = 2    # leading "parallel" grid axis (uses both v7x TCs)


def _round_up(x, m):
    return ((x + m - 1) // m) * m


def _cdiv(a, b):
    return (a + b - 1) // b


def _make_stats_kernel(num_voxels, tl, num_l_half, num_classes):
    """num_voxels = true L (un-padded); tl = lanes per tile (multiple of 128)."""

    def kernel(pred_ref, tgt_ref, out_ref, acc_ref):
        p = pl.program_id(0)            # core-split index (parallel)
        n = pl.program_id(1)            # batch index
        l = pl.program_id(2)            # voxel-block index within this split

        @pl.when(jnp.logical_and(n == 0, l == 0))
        def _():
            acc_ref[...] = jnp.zeros_like(acc_ref)

        # Mask lanes beyond the true voxel count: covers the partial tail tile
        # and the clamped out-of-range blocks of the second core split.
        logical_block = p * num_l_half + l
        lane = jax.lax.broadcasted_iota(jnp.int32, (1, tl), 1)
        valid = (logical_block * tl + lane) < num_voxels          # (1, tl) bool
        validf = valid.astype(jnp.float32)

        logits = pred_ref[0].astype(jnp.float32)                  # (C, tl)
        logits = jnp.where(valid, logits, 0.0)                    # kill garbage
        tgt = tgt_ref[0]                                          # (1, tl) int32

        # Numerically stable softmax / log-softmax along the class (sublane) axis.
        m = jnp.max(logits, axis=0, keepdims=True)                # (1, tl)
        shifted = logits - m
        e = jnp.exp(shifted)
        se = jnp.sum(e, axis=0, keepdims=True)                    # (1, tl)
        inv_se = pl.reciprocal(se, approx=True)                   # EUP slot
        probs = e * inv_se                                        # (C, tl)
        logp = shifted - jnp.log(se)                              # (C, tl)

        classes = jax.lax.broadcasted_iota(jnp.int32, (num_classes, tl), 0)
        one_hot = ((classes == tgt) & valid).astype(jnp.float32)  # (C, tl)

        # Full-width per-lane partial sums; lane reduction deferred to the end.
        acc_ref[0] += probs * validf          # sum_m probs[c, m]
        acc_ref[1] += probs * one_hot         # sum_m probs * onehot (intersection)
        acc_ref[2] += one_hot                 # sum_m onehot (target count)
        acc_ref[3] += -(one_hot * logp)       # sum_m -onehot * logp (CE sum)

        is_last = jnp.logical_and(n == pl.num_programs(1) - 1,
                                  l == pl.num_programs(2) - 1)

        @pl.when(is_last)
        def _():
            out_ref[0] = jnp.sum(acc_ref[...], axis=-1)           # (4, C)

    return kernel


def _run_stats_kernel(logits3d, tgt3d, *, tl):
    n_batch, num_classes, num_voxels = logits3d.shape
    num_l = _cdiv(num_voxels, tl)
    num_l_half = _cdiv(num_l, _NUM_CORE_SPLITS)

    def in_map(p, n, l):
        # Clamp so the DMA always stays in bounds; logical blocks past the end
        # are fully masked inside the kernel.
        return (n, 0, jnp.minimum(p * num_l_half + l, num_l - 1))

    kernel = _make_stats_kernel(num_voxels, tl, num_l_half, num_classes)
    return pl.pallas_call(
        kernel,
        out_shape=jax.ShapeDtypeStruct(
            (_NUM_CORE_SPLITS, _NUM_STATS, num_classes), jnp.float32),
        grid_spec=pltpu.PrefetchScalarGridSpec(
            num_scalar_prefetch=0,
            grid=(_NUM_CORE_SPLITS, n_batch, num_l_half),
            in_specs=[
                pl.BlockSpec((1, num_classes, tl), in_map),   # pred (N, C, L)
                pl.BlockSpec((1, 1, tl), in_map),             # target (N, 1, L)
            ],
            out_specs=pl.BlockSpec((1, _NUM_STATS, num_classes),
                                   lambda p, n, l: (p, 0, 0)),
            scratch_shapes=[
                pltpu.VMEM((_NUM_STATS, num_classes, tl), jnp.float32)],
        ),
        compiler_params=pltpu.CompilerParams(
            dimension_semantics=("parallel", "arbitrary", "arbitrary")),
    )(logits3d, tgt3d)


@functools.partial(jax.jit, static_argnames=("alpha", "ignore_index"))
def combined_loss(pred, target, *, alpha, ignore_index=None, smooth=1e-6):
    """alpha * CE(pred, target) + (1 - alpha) * soft_dice_loss(pred, target).

    pred:   (N, C, D, H, W) float (NCDHW, PyTorch convention; any float dtype)
    target: (N, D, H, W)    int
    """
    n_batch, num_classes = pred.shape[0], pred.shape[1]
    num_voxels = 1
    for s in pred.shape[2:]:
        num_voxels *= int(s)

    # Free reshapes in the native memory order: no HBM transpose, no upcast.
    logits = pred.reshape(n_batch, num_classes, num_voxels)
    tgt = target.reshape(n_batch, 1, num_voxels).astype(jnp.int32)

    tl = min(_MAX_TL, _round_up(num_voxels, 128))
    stats_per_split = _run_stats_kernel(logits, tgt, tl=tl)     # (2, 4, C)
    stats = jnp.sum(stats_per_split, axis=0)                    # (4, C)
    prob_sum, intersection, count, ce_per_class = (
        stats[0], stats[1], stats[2], stats[3])

    # CrossEntropyLoss (mean over all voxels; no ignore_index in the CE term).
    total_vox = n_batch * num_voxels
    ce = jnp.sum(ce_per_class) / total_vox

    # Soft Dice: per-class dice over the full volume, mean over kept classes.
    dice = (2.0 * intersection + smooth) / (prob_sum + count + smooth)
    if ignore_index is not None:
        keep = jnp.ones((num_classes,), jnp.float32).at[ignore_index].set(0.0)
        mean_dice = jnp.sum(dice * keep) / jnp.sum(keep)
    else:
        mean_dice = jnp.mean(dice)
    dice_loss = 1.0 - mean_dice

    return alpha * ce + (1.0 - alpha) * dice_loss


def _reference_combined_loss(pred, target, alpha, ignore_index=None, smooth=1e-6):
    """Pure-JAX reference mirroring the PyTorch module."""
    num_classes = pred.shape[1]
    logp = jax.nn.log_softmax(pred.astype(jnp.float32), axis=1)
    probs = jnp.exp(logp)
    one_hot = jnp.moveaxis(
        jax.nn.one_hot(target, num_classes, dtype=jnp.float32), -1, 1)
    ce = -jnp.mean(jnp.sum(one_hot * logp, axis=1))
    dices = []
    for c in range(num_classes):
        if ignore_index is not None and c == ignore_index:
            continue
        p = probs[:, c]
        t = one_hot[:, c]
        inter = jnp.sum(p * t)
        union = jnp.sum(p) + jnp.sum(t)
        dices.append((2 * inter + smooth) / (union + smooth))
    dice_loss = 1.0 - jnp.mean(jnp.stack(dices))
    return alpha * ce + (1.0 - alpha) * dice_loss


if __name__ == "__main__":
    # CombinedLoss has no learned parameters; alpha is its only config.
    alpha = 0.7
    ignore_index = None

    key = jax.random.PRNGKey(0)
    k1, k2 = jax.random.split(key)
    N, C, D, H, W = 2, 4, 4, 8, 8          # L = D*H*W = 256, total 512 voxels
    pred = jax.random.normal(k1, (N, C, D, H, W), dtype=jnp.float32)
    target = jax.random.randint(k2, (N, D, H, W), 0, C, dtype=jnp.int32)

    loss = combined_loss(pred, target, alpha=alpha, ignore_index=ignore_index)
    loss = jax.block_until_ready(loss)

    ref = _reference_combined_loss(pred, target, alpha, ignore_index)
    # Tolerance is 1e-4 because the softmax denominator uses the EUP
    # approximate reciprocal (pl.reciprocal(approx=True)).
    np.testing.assert_allclose(np.asarray(loss), np.asarray(ref),
                               rtol=1e-4, atol=1e-4)
    print("KERNEL_OK")
</pallas_src>

<mosaic_0001>
module attributes {stable_mosaic.version = 11 : i64} {
  func.func @kernel(%arg0: i32, %arg1: i32, %arg2: i32, %arg3: memref<1x4x256xf32, #tpu.memory_space<vmem>>, %arg4: memref<1x1x256xi32, #tpu.memory_space<vmem>>, %arg5: memref<1x4x4xf32, #tpu.memory_space<vmem>>, %arg6: memref<4x4x256xf32, #tpu.memory_space<vmem>>) attributes {dimension_semantics = [#tpu.dimension_semantics<parallel>, #tpu.dimension_semantics<arbitrary>, #tpu.dimension_semantics<arbitrary>], iteration_bounds = array<i64: 2, 2, 1>, scalar_prefetch = 0 : i64, scratch_operands = 1 : i64, tpu.core_type = #tpu.core_type<tc>, window_params = [{transform_indices = @transform_0, window_bounds = array<i64: 1, 4, 256>}, {transform_indices = @transform_1, window_bounds = array<i64: 1, 1, 256>}, {transform_indices = @transform_2, window_bounds = array<i64: 1, 4, 4>}]} {
    %c0_i32 = arith.constant 0 : i32
    %0 = arith.cmpi eq, %arg1, %c0_i32 : i32
    %c0_i32_0 = arith.constant 0 : i32
    %1 = arith.cmpi eq, %arg2, %c0_i32_0 : i32
    %2 = arith.andi %0, %1 : i1
    %3 = arith.extui %2 : i1 to i32
    %c0_i32_1 = arith.constant 0 : i32
    %4 = arith.cmpi ne, %3, %c0_i32_1 : i32
    scf.if %4 {
      %cst_35 = arith.constant 0.000000e+00 : f32
      %78 = vector.broadcast %cst_35 : f32 to vector<4x4x256xf32>
      %c0_36 = arith.constant 0 : index
      %c0_37 = arith.constant 0 : index
      %c0_38 = arith.constant 0 : index
      %79 = vector.load %arg6[%c0_36, %c0_37, %c0_38] : memref<4x4x256xf32, #tpu.memory_space<vmem>>, vector<4x4x256xf32>
      tpu.vector_store %arg6[%c0_36, %c0_37, %c0_38], %78 {strides = array<i32>} : memref<4x4x256xf32, #tpu.memory_space<vmem>>, vector<4x4x256xf32>,
    } else {
    }
    %c1_i32 = arith.constant 1 : i32
    %5 = arith.muli %arg0, %c1_i32 : i32
    %6 = arith.addi %5, %arg2 : i32
    %7 = tpu.iota {dimensions = array<i32: 1>} : vector<1x256xi32>
    %c256_i32 = arith.constant 256 : i32
    %8 = arith.muli %6, %c256_i32 : i32
    %9 = vector.broadcast %8 : i32 to vector<1x256xi32>
    %10 = arith.addi %9, %7 : vector<1x256xi32>
    %c256_i32_2 = arith.constant 256 : i32
    %11 = vector.broadcast %c256_i32_2 : i32 to vector<1x256xi32>
    %12 = arith.cmpi slt, %10, %11 : vector<1x256xi32>
    %13 = arith.extui %12 : vector<1x256xi1> to vector<1x256xi32>
    %14 = arith.sitofp %13 : vector<1x256xi32> to vector<1x256xf32>
    %c0 = arith.constant 0 : index
    %c0_3 = arith.constant 0 : index
    %c0_4 = arith.constant 0 : index
    %15 = vector.load %arg3[%c0, %c0_3, %c0_4] : memref<1x4x256xf32, #tpu.memory_space<vmem>>, vector<1x4x256xf32>
    %16 = vector.shape_cast %15 : vector<1x4x256xf32> to vector<4x256xf32>
    %cst = arith.constant 0.000000e+00 : f32
    %17 = vector.shape_cast %12 : vector<1x256xi1> to vector<1x256xi1>
    %18 = vector.broadcast %17 : vector<1x256xi1> to vector<4x256xi1>
    %19 = vector.broadcast %cst : f32 to vector<4x256xf32>
    %20 = arith.select %18, %16, %19 : vector<4x256xi1>, vector<4x256xf32>
    %c0_5 = arith.constant 0 : index
    %c0_6 = arith.constant 0 : index
    %c0_7 = arith.constant 0 : index
    %21 = vector.load %arg4[%c0_5, %c0_6, %c0_7] : memref<1x1x256xi32, #tpu.memory_space<vmem>>, vector<1x1x256xi32>
    %22 = vector.shape_cast %21 : vector<1x1x256xi32> to vector<1x256xi32>
    %cst_8 = arith.constant dense<0xFF800000> : vector<256xf32>
    %23 = vector.multi_reduction <maximumf>, %20, %cst_8 [0] : vector<4x256xf32> to vector<256xf32>
    %24 = vector.shape_cast %23 : vector<256xf32> to vector<1x256xf32>
    %25 = vector.broadcast %24 : vector<1x256xf32> to vector<4x256xf32>
    %26 = arith.subf %20, %25 : vector<4x256xf32>
    %27 = math.exp %26 : vector<4x256xf32>
    %cst_9 = arith.constant dense<0.000000e+00> : vector<256xf32>
    %28 = vector.multi_reduction <add>, %27, %cst_9 [0] : vector<4x256xf32> to vector<256xf32>
    %29 = vector.shape_cast %28 : vector<256xf32> to vector<1x256xf32>
    %30 = tpu.reciprocal %29 {approx = true} : vector<1x256xf32> -> vector<1x256xf32>
    %31 = vector.broadcast %30 : vector<1x256xf32> to vector<4x256xf32>
    %32 = arith.mulf %27, %31 : vector<4x256xf32>
    %33 = math.log %29 : vector<1x256xf32>
    %34 = vector.broadcast %33 : vector<1x256xf32> to vector<4x256xf32>
    %35 = arith.subf %26, %34 : vector<4x256xf32>
    %36 = tpu.iota {dimensions = array<i32: 0>} : vector<4x256xi32>
    %37 = vector.broadcast %22 : vector<1x256xi32> to vector<4x256xi32>
    %38 = arith.cmpi eq, %36, %37 : vector<4x256xi32>
    %39 = vector.broadcast %12 : vector<1x256xi1> to vector<4x256xi1>
    %40 = arith.andi %38, %39 : vector<4x256xi1>
    %41 = arith.extui %40 : vector<4x256xi1> to vector<4x256xi32>
    %42 = arith.sitofp %41 : vector<4x256xi32> to vector<4x256xf32>
    %c0_10 = arith.constant 0 : index
    %c0_11 = arith.constant 0 : index
    %c0_12 = arith.constant 0 : index
    %43 = vector.load %arg6[%c0_10, %c0_11, %c0_12] : memref<4x4x256xf32, #tpu.memory_space<vmem>>, vector<1x4x256xf32>
    %44 = vector.shape_cast %43 : vector<1x4x256xf32> to vector<4x256xf32>
    %45 = vector.broadcast %14 : vector<1x256xf32> to vector<4x256xf32>
    %46 = arith.mulf %32, %45 : vector<4x256xf32>
    %47 = arith.addf %44, %46 : vector<4x256xf32>
    %c0_13 = arith.constant 0 : index
    %c0_14 = arith.constant 0 : index
    %c0_15 = arith.constant 0 : index
    %48 = vector.load %arg6[%c0_13, %c0_14, %c0_15] : memref<4x4x256xf32, #tpu.memory_space<vmem>>, vector<1x4x256xf32>
    %49 = vector.shape_cast %48 : vector<1x4x256xf32> to vector<4x256xf32>
    %50 = vector.shape_cast %47 : vector<4x256xf32> to vector<1x4x256xf32>
    tpu.vector_store %arg6[%c0_13, %c0_14, %c0_15], %50 {strides = array<i32>} : memref<4x4x256xf32, #tpu.memory_space<vmem>>, vector<1x4x256xf32>,
    %c1 = arith.constant 1 : index
    %c0_16 = arith.constant 0 : index
    %c0_17 = arith.constant 0 : index
    %51 = vector.load %arg6[%c1, %c0_16, %c0_17] : memref<4x4x256xf32, #tpu.memory_space<vmem>>, vector<1x4x256xf32>
    %52 = vector.shape_cast %51 : vector<1x4x256xf32> to vector<4x256xf32>
    %53 = arith.mulf %32, %42 : vector<4x256xf32>
    %54 = arith.addf %52, %53 : vector<4x256xf32>
    %c1_18 = arith.constant 1 : index
    %c0_19 = arith.constant 0 : index
    %c0_20 = arith.constant 0 : index
    %55 = vector.load %arg6[%c1_18, %c0_19, %c0_20] : memref<4x4x256xf32, #tpu.memory_space<vmem>>, vector<1x4x256xf32>
    %56 = vector.shape_cast %55 : vector<1x4x256xf32> to vector<4x256xf32>
    %57 = vector.shape_cast %54 : vector<4x256xf32> to vector<1x4x256xf32>
    tpu.vector_store %arg6[%c1_18, %c0_19, %c0_20], %57 {strides = array<i32>} : memref<4x4x256xf32, #tpu.memory_space<vmem>>, vector<1x4x256xf32>,
    %c2 = arith.constant 2 : index
    %c0_21 = arith.constant 0 : index
    %c0_22 = arith.constant 0 : index
    %58 = vector.load %arg6[%c2, %c0_21, %c0_22] : memref<4x4x256xf32, #tpu.memory_space<vmem>>, vector<1x4x256xf32>
    %59 = vector.shape_cast %58 : vector<1x4x256xf32> to vector<4x256xf32>
    %60 = arith.addf %59, %42 : vector<4x256xf32>
    %c2_23 = arith.constant 2 : index
    %c0_24 = arith.constant 0 : index
    %c0_25 = arith.constant 0 : index
    %61 = vector.load %arg6[%c2_23, %c0_24, %c0_25] : memref<4x4x256xf32, #tpu.memory_space<vmem>>, vector<1x4x256xf32>
    %62 = vector.shape_cast %61 : vector<1x4x256xf32> to vector<4x256xf32>
    %63 = vector.shape_cast %60 : vector<4x256xf32> to vector<1x4x256xf32>
    tpu.vector_store %arg6[%c2_23, %c0_24, %c0_25], %63 {strides = array<i32>} : memref<4x4x256xf32, #tpu.memory_space<vmem>>, vector<1x4x256xf32>,
    %c3 = arith.constant 3 : index
    %c0_26 = arith.constant 0 : index
    %c0_27 = arith.constant 0 : index
    %64 = vector.load %arg6[%c3, %c0_26, %c0_27] : memref<4x4x256xf32, #tpu.memory_space<vmem>>, vector<1x4x256xf32>
    %65 = vector.shape_cast %64 : vector<1x4x256xf32> to vector<4x256xf32>
    %66 = arith.mulf %42, %35 : vector<4x256xf32>
    %cst_28 = arith.constant 0.000000e+00 : f32
    %67 = vector.broadcast %cst_28 : f32 to vector<4x256xf32>
    %68 = arith.subf %67, %66 : vector<4x256xf32>
    %69 = arith.addf %65, %68 : vector<4x256xf32>
    %c3_29 = arith.constant 3 : index
    %c0_30 = arith.constant 0 : index
    %c0_31 = arith.constant 0 : index
    %70 = vector.load %arg6[%c3_29, %c0_30, %c0_31] : memref<4x4x256xf32, #tpu.memory_space<vmem>>, vector<1x4x256xf32>
    %71 = vector.shape_cast %70 : vector<1x4x256xf32> to vector<4x256xf32>
    %72 = vector.shape_cast %69 : vector<4x256xf32> to vector<1x4x256xf32>
    tpu.vector_store %arg6[%c3_29, %c0_30, %c0_31], %72 {strides = array<i32>} : memref<4x4x256xf32, #tpu.memory_space<vmem>>, vector<1x4x256xf32>,
    %c1_i32_32 = arith.constant 1 : i32
    %73 = arith.cmpi eq, %arg1, %c1_i32_32 : i32
    %c0_i32_33 = arith.constant 0 : i32
    %74 = arith.cmpi eq, %arg2, %c0_i32_33 : i32
    %75 = arith.andi %73, %74 : i1
    %76 = arith.extui %75 : i1 to i32
    %c0_i32_34 = arith.constant 0 : i32
    %77 = arith.cmpi ne, %76, %c0_i32_34 : i32
    scf.if %77 {
      %c0_35 = arith.constant 0 : index
      %c0_36 = arith.constant 0 : index
      %c0_37 = arith.constant 0 : index
      %78 = vector.load %arg6[%c0_35, %c0_36, %c0_37] : memref<4x4x256xf32, #tpu.memory_space<vmem>>, vector<4x4x256xf32>
      %cst_38 = arith.constant dense<0.000000e+00> : vector<4x4xf32>
      %79 = vector.multi_reduction <add>, %78, %cst_38 [2] : vector<4x4x256xf32> to vector<4x4xf32>
      %c0_39 = arith.constant 0 : index
      %c0_40 = arith.constant 0 : index
      %c0_41 = arith.constant 0 : index
      %80 = vector.load %arg5[%c0_39, %c0_40, %c0_41] : memref<1x4x4xf32, #tpu.memory_space<vmem>>, vector<1x4x4xf32>
      %81 = vector.shape_cast %80 : vector<1x4x4xf32> to vector<4x4xf32>
      %82 = vector.shape_cast %79 : vector<4x4xf32> to vector<1x4x4xf32>
      tpu.vector_store %arg5[%c0_39, %c0_40, %c0_41], %82 {strides = array<i32>} : memref<1x4x4xf32, #tpu.memory_space<vmem>>, vector<1x4x4xf32>,
    } else {
    }
    return
  }
  func.func @transform_0(%arg0: i32, %arg1: i32, %arg2: i32) -> (i32, i32, i32) {
    %c1_i32 = arith.constant 1 : i32
    %0 = arith.muli %arg0, %c1_i32 : i32
    %1 = arith.addi %0, %arg2 : i32
    %c0_i32 = arith.constant 0 : i32
    %2 = arith.minsi %1, %c0_i32 : i32
    %c0_i32_0 = arith.constant 0 : i32
    %c0_i32_1 = arith.constant 0 : i32
    return %arg1, %c0_i32_0, %2 : i32, i32, i32
  }
  func.func @transform_1(%arg0: i32, %arg1: i32, %arg2: i32) -> (i32, i32, i32) {
    %c1_i32 = arith.constant 1 : i32
    %0 = arith.muli %arg0, %c1_i32 : i32
    %1 = arith.addi %0, %arg2 : i32
    %c0_i32 = arith.constant 0 : i32
    %2 = arith.minsi %1, %c0_i32 : i32
    %c0_i32_0 = arith.constant 0 : i32
    %c0_i32_1 = arith.constant 0 : i32
    return %arg1, %c0_i32_0, %2 : i32, i32, i32
  }
  func.func @transform_2(%arg0: i32, %arg1: i32, %arg2: i32) -> (i32, i32, i32) {
    %c0_i32 = arith.constant 0 : i32
    %c0_i32_0 = arith.constant 0 : i32
    %c0_i32_1 = arith.constant 0 : i32
    return %arg0, %c0_i32, %c0_i32_0 : i32, i32, i32
  }
}

</mosaic_0001>

<llo_original>
// kernel: combined_loss.1
$region0: #{combined_loss.1}
  #allocation0 [shape = 'u32[]', space=smem, size = 0x4, offset = 0x4, fixed_abs, tag = 'smem constant byte address 0x4 - core index']
  #allocation1 [shape = 'u32[144,128]{1,0:T(1,128)}', space=vmem, size = 0x12000, scoped, tag = 'internal scratch']
  #allocation2 [shape = 'f32[4,4,256]{2,1,0:T(4,128)}', space=vmem, size = 0x4000, scoped, tag = 'scratch operand']
  %s0 = inlined_call_operand.vmem [shape: f32[2,4,256], index: 0, kind: input, shape index: {}]
  %s1 = inlined_call_operand.vmem [shape: s32[2,1,256], index: 1, kind: input, shape index: {}]
  %s2 = inlined_call_operand.vmem [shape: f32[2,4,4], index: 2, kind: output, shape index: {}]
  %s3 = sld [smem:[#allocation0]]
  $region49: #{combined_loss.1} parent=0
    _
  %s5 = ssub.s32 1, %s3
  %s6 = scalar_select 0, %s5, %s3
  loop: start=0, step=1, limit=6
  $region2: #{combined_loss.1} parent=0 // loop_pre_header
    _
  $region3: #{combined_loss.1} parent=0 // loop_header
    %s8 = sphi 0, %s12
    %p9 = scmp.ge.s32.totalorder %s8, 6
    %s15 = sphi 0, %s34
    %s16 = sphi 0, %s30
    %s17 = sphi 0, %s26
    %s18 = sphi 0, %s15
    %s19 = sphi 0, %s16
    %s20 = sphi 0, %s17
    %s21 = sphi 0, %s18
    %s22 = sphi 0, %s19
    %s23 = sphi 0, %s20
    %s45 = sphi 0, %s47
    %s48 = sphi 0, %s45
    %s49 = sphi 0, %s48
    %s65 = sphi 0, %s49
    %s79 = sphi 0, %s81
    %s82 = sphi 0, %s79
    %s83 = sphi 0, %s82
    %s99 = sphi 0, %s83
    %s105 = sphi 0, %s107
    %s108 = sphi 0, %s105
    %s109 = sphi 0, %s108
    %s125 = sphi 0, %s109
  $region4: #{combined_loss.1} parent=0 // loop_header_branch
    %11 = sbr.rel (%p9) target = $region8
  $region5: #{combined_loss.1} parent=0 // loop_body
    %s13 = ssub.s32 %s8, 1
    %s14 = ssub.s32 %s8, 2
    %s24 = sadd.s32 1, %s17
    %p25 = scmp.ge.s32.totalorder %s24, 1
    %s26 = scalar_select %p25, 0, %s24
    %s27 = sadd.s32 1, %s16
    %s28 = scalar_select %p25, %s27, %s16
    %p29 = scmp.ge.s32.totalorder %s28, 2
    %s30 = scalar_select %p29, 0, %s28
    %s31 = sadd.s32 1, %s15
    %s32 = scalar_select %p29, %s31, %s15
    %p33 = scmp.ge.s32.totalorder %s32, 2
    %s34 = scalar_select %p33, 0, %s32
    %s35 = sadd.s32 %s15, %s17
    %p36 = scmp.lt.s32.totalorder %s35, 0
    %s37 = scalar_select %p36, %s35, 0
    %s38 = sadd.s32 %s34, %s26
    %p39 = scmp.lt.s32.totalorder %s38, 0
    %s40 = scalar_select %p39, %s38, 0
    %s41 = ssub.s32 %s16, %s30
    %s42 = ssub.s32 %s37, %s40
    %s43 = sor.u32 %s41, %s42
    %p44 = scmp.eq.s32.totalorder %s43, 0
    %s46 = sadd.s32 %s45, 1
    %s47 = scalar_select %p44, %s45, %s46
    %p50 = pneg %p44
    %p51 = scmp.eq.s32.totalorder %s8, 3
    %p52 = por %p50, %p51
    %p53 = scmp.ne.s32.totalorder %s45, %s48
    %p54 = scmp.eq.s32.totalorder %s8, 0
    %p55 = por %p53, %p54
    %p56 = scmp.ne.s32.totalorder %s45, %s48
    %p57 = scmp.eq.s32.totalorder %s13, 3
    %p58 = por %p56, %p57
    %p59 = scmp.ne.s32.totalorder %s48, %s49
    %p60 = scmp.eq.s32.totalorder %s13, 0
    %p61 = por %p59, %p60
    %p62 = scmp.ne.s32.totalorder %s48, %s49
    %p63 = scmp.eq.s32.totalorder %s14, 3
    %p64 = por %p62, %p63
    %p66 = scmp.ne.s32.totalorder %s49, %s65
    %p67 = scmp.eq.s32.totalorder %s14, 0
    %p68 = por %p66, %p67
    %s69 = sadd.s32 %s15, %s17
    %p70 = scmp.lt.s32.totalorder %s69, 0
    %s71 = scalar_select %p70, %s69, 0
    %s72 = sadd.s32 %s34, %s26
    %p73 = scmp.lt.s32.totalorder %s72, 0
    %s74 = scalar_select %p73, %s72, 0
    %s75 = ssub.s32 %s16, %s30
    %s76 = ssub.s32 %s71, %s74
    %s77 = sor.u32 %s75, %s76
    %p78 = scmp.eq.s32.totalorder %s77, 0
    %s80 = sadd.s32 %s79, 1
    %s81 = scalar_select %p78, %s79, %s80
    %p84 = pneg %p78
    %p85 = scmp.eq.s32.totalorder %s8, 3
    %p86 = por %p84, %p85
    %p87 = scmp.ne.s32.totalorder %s79, %s82
    %p88 = scmp.eq.s32.totalorder %s8, 0
    %p89 = por %p87, %p88
    %p90 = scmp.ne.s32.totalorder %s79, %s82
    %p91 = scmp.eq.s32.totalorder %s13, 3
    %p92 = por %p90, %p91
    %p93 = scmp.ne.s32.totalorder %s82, %s83
    %p94 = scmp.eq.s32.totalorder %s13, 0
    %p95 = por %p93, %p94
    %p96 = scmp.ne.s32.totalorder %s82, %s83
    %p97 = scmp.eq.s32.totalorder %s14, 3
    %p98 = por %p96, %p97
    %p100 = scmp.ne.s32.totalorder %s83, %s99
    %p101 = scmp.eq.s32.totalorder %s14, 0
    %p102 = por %p100, %p101
    %s103 = ssub.s32 %s15, %s34
    %p104 = scmp.eq.s32.totalorder %s103, 0
    %s106 = sadd.s32 %s105, 1
    %s107 = scalar_select %p104, %s105, %s106
    %p110 = pneg %p104
    %p111 = scmp.eq.s32.totalorder %s8, 3
    %p112 = por %p110, %p111
    %p113 = scmp.ne.s32.totalorder %s105, %s108
    %p114 = scmp.eq.s32.totalorder %s8, 0
    %p115 = por %p113, %p114
    %p116 = scmp.ne.s32.totalorder %s105, %s108
    %p117 = scmp.eq.s32.totalorder %s13, 3
    %p118 = por %p116, %p117
    %p119 = scmp.ne.s32.totalorder %s108, %s109
    %p120 = scmp.eq.s32.totalorder %s13, 0
    %p121 = por %p119, %p120
    %p122 = scmp.ne.s32.totalorder %s108, %s109
    %p123 = scmp.eq.s32.totalorder %s14, 3
    %p124 = por %p122, %p123
    %p126 = scmp.ne.s32.totalorder %s109, %s125
    %p127 = scmp.eq.s32.totalorder %s14, 0
    %p128 = por %p126, %p127
    %p129 = scmp.le.s32.totalorder 1, %s8
    %p130 = scmp.lt.s32.totalorder %s8, 5
    %p131 = pnand %p129, %p130
    %p132 = pneg %p131
    // Predicated region
    $region9: #{combined_loss.1} parent=5 // pred_check
      _
    $region10: #{combined_loss.1} parent=5 // pred_check_branch
      %134 = sbr.rel (%p131) target = $region12
    $region11: #{combined_loss.1} parent=5 // pred_region
      %s135 = ssub.s32 %s8, 1
    $region12: #{combined_loss.1} parent=5 // pred_fallthru
      _
    %p136 = scmp.lt.s32.totalorder %s8, 4
    // Predicated region
    $region13: #{combined_loss.1} parent=5 // pred_check
      %p137 = pneg %p136
    $region14: #{combined_loss.1} parent=5 // pred_check_branch
      %139 = sbr.rel (%p137) target = $region16
    $region15: #{combined_loss.1} parent=5 // pred_region
      // Predicated region
      $region17: #{combined_loss.1} parent=15 // pred_check
        %p140 = pneg %p55
      $region18: #{combined_loss.1} parent=15 // pred_check_branch
        %142 = sbr.rel (%p140) target = $region20
      $region19: #{combined_loss.1} parent=15 // pred_region
        %s143 = sadd.s32 %s15, %s17
        %p144 = scmp.lt.s32.totalorder %s143, 0
        %s145 = scalar_select %p144, %s143, 0
        %s146 = smul.u32 2, %s145
        %p147 = scmp.lt.s32.totalorder %s16, 1
        %s148 = scalar_select %p147, %s16, 1
        %p149 = scmp.lt.s32.totalorder %s146, 1
        %s150 = scalar_select %p149, %s146, 1
        %s151 = smul.addr %s148, 2
        %s152 = sadd.s32 %s150, %s151
        %s153 = smul.addr %s152, 4
        %s154 = scalar_lea.vmem %s0, %s153
        %s155 = sadd.s32 %s15, %s17
        %p156 = scmp.lt.s32.totalorder %s155, 0
        %s157 = scalar_select %p156, %s155, 0
        %s158 = smul.u32 2, %s157
      $region20: #{combined_loss.1} parent=15 // pred_fallthru
        _
      // Predicated region
      $region21: #{combined_loss.1} parent=15 // pred_check
        %p159 = pneg %p89
      $region22: #{combined_loss.1} parent=15 // pred_check_branch
        %161 = sbr.rel (%p159) target = $region24
      $region23: #{combined_loss.1} parent=15 // pred_region
        %s162 = sadd.s32 %s15, %s17
        %p163 = scmp.lt.s32.totalorder %s162, 0
        %s164 = scalar_select %p163, %s162, 0
        %s165 = smul.u32 2, %s164
        %p166 = scmp.lt.s32.totalorder %s16, 1
        %s167 = scalar_select %p166, %s16, 1
        %p168 = scmp.lt.s32.totalorder %s165, 1
        %s169 = scalar_select %p168, %s165, 1
        %s170 = smul.addr %s167, 2
        %s171 = sadd.s32 %s169, %s170
        %s172 = scalar_lea.vmem %s1, %s171
        %s173 = sadd.s32 %s15, %s17
        %p174 = scmp.lt.s32.totalorder %s173, 0
        %s175 = scalar_select %p174, %s173, 0
        %s176 = smul.u32 2, %s175
      $region24: #{combined_loss.1} parent=15 // pred_fallthru
        _
    $region16: #{combined_loss.1} parent=5 // pred_fallthru
      _
    %p177 = scmp.le.s32.totalorder 1, %s8
    %p178 = scmp.lt.s32.totalorder %s8, 5
    %p179 = pnand %p177, %p178
    %p180 = pneg %p179
    // Predicated region
    $region25: #{combined_loss.1} parent=5 // pred_check
      _
    $region26: #{combined_loss.1} parent=5 // pred_check_branch
      %182 = sbr.rel (%p179) target = $region28
    $region27: #{combined_loss.1} parent=5 // pred_region
      %s183 = ssub.s32 %s8, 1
      %s184 = sadd.s32 %s18, %s20
      %p185 = scmp.lt.s32.totalorder %s184, 0
      %s186 = scalar_select %p185, %s184, 0
      %s187 = smul.u32 2, %s186
      %p188 = scmp.lt.s32.totalorder %s19, 1
      %s189 = scalar_select %p188, %s19, 1
      %p190 = scmp.lt.s32.totalorder %s187, 1
      %s191 = scalar_select %p190, %s187, 1
      %s192 = smul.addr %s189, 2
      %s193 = sadd.s32 %s191, %s192
      %s194 = smul.addr %s193, 4
      %s195 = scalar_lea.vmem %s0, %s194
      %p196 = pneg %p61
      %p197 = pneg %p58
      %s198 = sadd.s32 %s18, %s20
      %p199 = scmp.lt.s32.totalorder %s198, 0
      %s200 = scalar_select %p199, %s198, 0
      %s201 = smul.u32 2, %s200
      %p202 = scmp.lt.s32.totalorder %s19, 1
      %s203 = scalar_select %p202, %s19, 1
      %p204 = scmp.lt.s32.totalorder %s201, 1
      %s205 = scalar_select %p204, %s201, 1
      %s206 = smul.addr %s203, 2
      %s207 = sadd.s32 %s205, %s206
      %s208 = scalar_lea.vmem %s1, %s207
      %p209 = pneg %p95
      %p210 = pneg %p92
      %p211 = pneg %p121
      %p212 = pneg %p118
      %p213 = scmp.lt.s32.totalorder %s18, 1
      %s214 = scalar_select %p213, %s18, 1
      %s215 = smul.addr %s214, 4
      %s216 = scalar_lea.vmem %s2, %s215
      %s217 = sadd.s32 %s18, %s20
      %p218 = scmp.lt.s32.totalorder %s217, 0
      %s219 = scalar_select %p218, %s217, 0
      %s220 = smul.u32 2, %s219
      %p221 = scmp.lt.s32.totalorder %s19, 1
      %s222 = scalar_select %p221, %s19, 1
      %p223 = scmp.lt.s32.totalorder %s220, 1
      %s224 = scalar_select %p223, %s220, 1
      %s225 = smul.addr %s222, 2
      %s226 = sadd.s32 %s224, %s225
      %s227 = smul.addr %s226, 4
      %s228 = scalar_lea.vmem %s0, %s227
      %s229 = sadd.s32 %s18, %s20
      %p230 = scmp.lt.s32.totalorder %s229, 0
      %s231 = scalar_select %p230, %s229, 0
      %s232 = smul.u32 2, %s231
      %s233 = sadd.s32 %s18, %s20
      %p234 = scmp.lt.s32.totalorder %s233, 0
      %s235 = scalar_select %p234, %s233, 0
      %s236 = smul.u32 2, %s235
      %p237 = scmp.lt.s32.totalorder %s19, 1
      %s238 = scalar_select %p237, %s19, 1
      %p239 = scmp.lt.s32.totalorder %s236, 1
      %s240 = scalar_select %p239, %s236, 1
      %s241 = smul.addr %s238, 2
      %s242 = sadd.s32 %s240, %s241
      %s243 = scalar_lea.vmem %s1, %s242
      %s244 = sadd.s32 %s18, %s20
      %p245 = scmp.lt.s32.totalorder %s244, 0
      %s246 = scalar_select %p245, %s244, 0
      %s247 = smul.u32 2, %s246
      %p248 = scmp.lt.s32.totalorder %s18, 1
      %s249 = scalar_select %p248, %s18, 1
      %s250 = smul.addr %s249, 4
      %s251 = scalar_lea.vmem %s2, %s250
      %p252 = scmp.eq.s32.totalorder %s19, 0
      %p253 = scmp.eq.s32.totalorder %s20, 0
      %p254 = pnand %p252, %p253
      %p255 = pneg %p254
      // Predicated region
      $region29: #{combined_loss.1} parent=27 // pred_check
        _
      $region30: #{combined_loss.1} parent=27 // pred_check_branch
        %257 = sbr.rel (%p254) target = $region32
      $region31: #{combined_loss.1} parent=27 // pred_region
        %258 = vst [vmem:[#allocation2] sm:$0xff] 0.0
        %259 = vst [vmem:[#allocation2 + $0x8] sm:$0xff] 0.0
        %260 = vst [vmem:[#allocation2 + $0x10] sm:$0xff] 0.0
        %261 = vst [vmem:[#allocation2 + $0x18] sm:$0xff] 0.0
      $region32: #{combined_loss.1} parent=27 // pred_fallthru
        _
      %s262 = sadd.s32 %s18, %s20
      %v263 = vlaneseq
      %v264 = vand.u32 %v263, 127
      %v265 = vadd.s32 %v264, 128
      %s266 = smul.u32 %s262, 256
      %v267 = vstv %s266
      %v268 = vadd.s32 %v267, %v264
      %v269 = vadd.s32 %v267, %v265
      %vm270 = vcmp.lt.s32.totalorder %v268, 256
      %vm271 = vcmp.lt.s32.totalorder %v269, 256
      %v272 = vsel %vm270, 1, 0
      %v273 = vsel %vm271, 1, 0
      %v274 = vcvt.s32.f32 %v272
      %v275 = vcvt.s32.f32 %v273
      %v276 = vld [vmem:[%s228] sm:$0xff]
      %vm277 = vcmp.eq.s32.totalorder %v272, 1
      %vm278 = vcmp.eq.s32.totalorder %v273, 1
      %v280 = vcombine.high %v276, %v276
      %v282 = vsel %vm277, %v276, 0.0
      %v283 = vsel %vm278, %v280, 0.0
      %v284 = vld [vmem:[%s243] sm:$0x3]
      %vm285 = vcmask 1043456
      %v286 = vsel %vm285, %v282, -inf
      %v287 = vrot.slane %v286, 4
      %v288 = vmax.f32 %v286, %v287
      %v289 = vrot.slane %v288, 2
      %v290 = vmax.f32 %v288, %v289
      %v291 = vrot.slane %v290, 1
      %v292 = vmax.f32 %v290, %v291
      %v293 = vsel %vm285, %v283, -inf
      %v294 = vrot.slane %v293, 4
      %v295 = vmax.f32 %v293, %v294
      %v296 = vrot.slane %v295, 2
      %v297 = vmax.f32 %v295, %v296
      %v298 = vrot.slane %v297, 1
      %v299 = vmax.f32 %v297, %v298
      %v300 = vsub.f32 %v282, %v292
      %v301 = vsub.f32 %v283, %v299
      %v302 = vmul.f32 %v300, 1.442695
      %v303 = vpow.pop %v302
      %v304 = vmul.f32 %v301, 1.442695
      %v305 = vpow.pop %v304
      %v306 = vsel %vm285, %v303, 0.0
      %v307 = vrot.slane %v306, 4
      %v308 = vadd.f32 %v306, %v307
      %v309 = vrot.slane %v308, 2
      %v310 = vadd.f32 %v308, %v309
      %v311 = vrot.slane %v310, 1
      %v312 = vadd.f32 %v310, %v311
      %v313 = vsel %vm285, %v305, 0.0
      %v314 = vrot.slane %v313, 4
      %v315 = vadd.f32 %v313, %v314
      %v316 = vrot.slane %v315, 2
      %v317 = vadd.f32 %v315, %v316
      %v318 = vrot.slane %v317, 1
      %v319 = vadd.f32 %v317, %v318
      %v320 = vrcp.pop %v312
      %v321 = vrcp.pop %v319
      %v322 = vmul.f32 %v303, %v320
      %v323 = vmul.f32 %v305, %v321
      %v324 = vlog2.pop %v312
      %v325 = vmul.f32 %v324, 0.6931472
      %v326 = vlog2.pop %v319
      %v327 = vmul.f32 %v326, 0.6931472
      %v328 = vsub.f32 %v300, %v325
      %v329 = vsub.f32 %v301, %v327
      %v330 = vlaneseq
      %v331 = vshrl.u32 %v330, 7
      %v332 = vlaneseq
      %v333 = vshrl.u32 %v332, 7
      %v334 = vsub.s32 0, %v333
      %v335 = vrot.slane %v284, %v334
      %v336 = vlaneseq
      %v337 = vshrl.u32 %v336, 7
      %v338 = vsub.s32 1, %v337
      %v339 = vrot.slane %v284, %v338
      %vm340 = vcmp.eq.s32.totalorder %v331, %v335
      %vm341 = vcmp.eq.s32.totalorder %v331, %v339
      %vm342 = vmand %vm340, %vm277
      %vm343 = vmand %vm341, %vm278
      %v344 = vsel %vm342, 1, 0
      %v345 = vsel %vm343, 1, 0
      %v346 = vcvt.s32.f32 %v344
      %v347 = vcvt.s32.f32 %v345
      %v348 = vld [vmem:[#allocation2] sm:$0xff]
      %v349 = vmul.f32 %v322, %v274
      %v350 = vmul.f32 %v323, %v275
      %v353 = vcombine.low %v349, %v350
      %v355 = vadd.f32 %v348, %v353
      %356 = vst [vmem:[#allocation2] sm:$0xff] %v355
      %s357 = scalar_lea.vmem [#allocation2], 8
      %v358 = vld [vmem:[%s357] sm:$0xff]
      %v359 = vmul.f32 %v322, %v346
      %v360 = vmul.f32 %v323, %v347
      %v363 = vcombine.low %v359, %v360
      %v365 = vadd.f32 %v358, %v363
      %366 = vst [vmem:[%s357] sm:$0xff] %v365
      %s367 = scalar_lea.vmem [#allocation2], 16
      %v368 = vld [vmem:[%s367] sm:$0xff]
      %v371 = vcombine.low %v346, %v347
      %v373 = vadd.f32 %v368, %v371
      %374 = vst [vmem:[%s367] sm:$0xff] %v373
      %s375 = scalar_lea.vmem [#allocation2], 24
      %v376 = vld [vmem:[%s375] sm:$0xff]
      %v377 = vmul.f32 %v346, %v328
      %v378 = vmul.f32 %v347, %v329
      %v379 = vsub.f32 0.0, %v377
      %v380 = vsub.f32 0.0, %v378
      %v383 = vcombine.low %v379, %v380
      %v385 = vadd.f32 %v376, %v383
      %386 = vst [vmem:[%s375] sm:$0xff] %v385
      %p387 = scmp.eq.s32.totalorder %s19, 1
      %p388 = pnand %p387, %p253
      %p389 = pneg %p388
      // Predicated region
      $region33: #{combined_loss.1} parent=27 // pred_check
        _
      $region34: #{combined_loss.1} parent=27 // pred_check_branch
        %391 = sbr.rel (%p388) target = $region36
      $region35: #{combined_loss.1} parent=27 // pred_region
        %v392 = vld [vmem:[#allocation2] sm:$0xff]
        %v393 = vld [vmem:[#allocation2 + $0x8] sm:$0xff]
        %v394 = vld [vmem:[#allocation2 + $0x10] sm:$0xff]
        %v395 = vld [vmem:[#allocation2 + $0x18] sm:$0xff]
        %v400 = vcombine.high %v392, %v392
        %v401 = vcombine.high %v393, %v393
        %v402 = vcombine.high %v394, %v394
        %v403 = vcombine.high %v395, %v395
        %v408 = vsel %vm285, %v392, 0.0
        %v409 = vsel %vm285, %v400, 0.0
        %v410 = vadd.f32 %v408, %v409
        %411 = vadd.xlane.f32.xlu0 %v410
        %v412 = vpop.xlane.xlu0 %411
        %v413 = vsel %vm285, %v393, 0.0
        %v414 = vsel %vm285, %v401, 0.0
        %v415 = vadd.f32 %v413, %v414
        %416 = vadd.xlane.f32.xlu0 %v415
        %v417 = vpop.xlane.xlu0 %416
        %v418 = vsel %vm285, %v394, 0.0
        %v419 = vsel %vm285, %v402, 0.0
        %v420 = vadd.f32 %v418, %v419
        %421 = vadd.xlane.f32.xlu0 %v420
        %v422 = vpop.xlane.xlu0 %421
        %v423 = vsel %vm285, %v395, 0.0
        %v424 = vsel %vm285, %v403, 0.0
        %v425 = vadd.f32 %v423, %v424
        %426 = vadd.xlane.f32.xlu0 %v425
        %v427 = vpop.xlane.xlu0 %426
        %v432 = vlaneseq
        %v433 = vshrl.u32 %v432, 7
        %v434 = vsub.s32 %v264, %v433
        %v435 = vrot.slane %v412, %v434
        %v436 = vlaneseq
        %v437 = vshrl.u32 %v436, 7
        %v438 = vsub.s32 %v264, %v437
        %v439 = vrot.slane %v417, %v438
        %v440 = vlaneseq
        %v441 = vshrl.u32 %v440, 7
        %v442 = vsub.s32 %v264, %v441
        %v443 = vrot.slane %v422, %v442
        %v444 = vlaneseq
        %v445 = vshrl.u32 %v444, 7
        %v446 = vsub.s32 %v264, %v445
        %v447 = vrot.slane %v427, %v446
        %vm448 = vcmask 1041409
        %v449 = vsel %vm448, %v439, %v435
        %vm450 = vcmask 1042434
        %v451 = vsel %vm450, %v443, %v449
        %vm452 = vcmask 1043459
        %v453 = vsel %vm452, %v447, %v451
        %vm455 = vcmask 27648
        %456 = vst.msk [vmem:[%s251] sm:$0xf] %vm455, %v453
      $region36: #{combined_loss.1} parent=27 // pred_fallthru
        _
      %p457 = scmp.lt.s32.totalorder %s18, 1
      %s458 = scalar_select %p457, %s18, 1
      %s459 = smul.addr %s458, 4
      %s460 = scalar_lea.vmem %s2, %s459
      // Predicated region
      $region37: #{combined_loss.1} parent=27 // pred_check
        %p461 = pneg %p118
      $region38: #{combined_loss.1} parent=27 // pred_check_branch
        %463 = sbr.rel (%p461) target = $region40
      $region39: #{combined_loss.1} parent=27 // pred_region
        _
      $region40: #{combined_loss.1} parent=27 // pred_fallthru
        _
    $region28: #{combined_loss.1} parent=5 // pred_fallthru
      _
    %p464 = scmp.le.s32.totalorder 2, %s8
    // Predicated region
    $region41: #{combined_loss.1} parent=5 // pred_check
      %p465 = pneg %p464
    $region42: #{combined_loss.1} parent=5 // pred_check_branch
      %467 = sbr.rel (%p465) target = $region44
    $region43: #{combined_loss.1} parent=5 // pred_region
      %s468 = ssub.s32 %s8, 2
      // Predicated region
      $region45: #{combined_loss.1} parent=43 // pred_check
        %p469 = pneg %p124
      $region46: #{combined_loss.1} parent=43 // pred_check_branch
        %471 = sbr.rel (%p469) target = $region48
      $region47: #{combined_loss.1} parent=43 // pred_region
        %p472 = scmp.lt.s32.totalorder %s21, 1
        %s473 = scalar_select %p472, %s21, 1
        %s474 = smul.addr %s473, 4
        %s475 = scalar_lea.vmem %s2, %s474
      $region48: #{combined_loss.1} parent=43 // pred_fallthru
        _
    $region44: #{combined_loss.1} parent=5 // pred_fallthru
      _
  $region6: #{combined_loss.1} parent=0 // loop_footer
    %s12 = sadd.s32 1, %s8
  $region7: #{combined_loss.1} parent=0 // loop_footer_branch
    %7 = sbr.rel target = $region3
  $region8: #{combined_loss.1} parent=0 // loop_exit
    _

</llo_original>
